<compile_context>
chip_gen: v6e
topology: v6e:2x2x1
jax: 0.10.0
libtpu: 0.0.40
codegen_flags: <defaults>
</compile_context>

<pallas_src>
import jax
import jax.numpy as jnp
from jax.experimental import pallas as pl
from jax.experimental.pallas import tpu as pltpu


def _lora_linear_kernel(x_ref, wt_ref, at_ref, bt_ref, bias_ref, o_ref,
                        acc_ref, xa_ref):
    # x_ref:    (tm, tk)     current tile of rows x K-chunk
    # wt_ref:   (tk, tn)     pre-transposed base weight chunk (K x N layout)
    # at_ref:   (tk, rp)     pre-transposed, pre-scaled lora_A chunk
    # bt_ref:   (rp, tn)     pre-transposed lora_B chunk
    # bias_ref: (1, tn)
    # o_ref:    (tm, tn)
    # acc_ref:  (tm, tn) f32 scratch  (base matmul accumulator over K)
    # xa_ref:   (tm, rp) f32 scratch  (x @ A^T accumulator over K)
    k = pl.program_id(2)

    @pl.when(k == 0)
    def _():
        acc_ref[...] = jnp.zeros_like(acc_ref)
        xa_ref[...] = jnp.zeros_like(xa_ref)

    x = x_ref[...]
    acc_ref[...] += jnp.dot(x, wt_ref[...], preferred_element_type=jnp.float32)
    xa_ref[...] += jnp.dot(x, at_ref[...], preferred_element_type=jnp.float32)

    @pl.when(k == pl.num_programs(2) - 1)
    def _():
        lora = jnp.dot(xa_ref[...].astype(bt_ref.dtype), bt_ref[...],
                       preferred_element_type=jnp.float32)
        o_ref[...] = (acc_ref[...] + bias_ref[...] + lora).astype(o_ref.dtype)


def _round_up(x, m):
    return ((x + m - 1) // m) * m


def lora_linear(x, weight, bias, lora_A, lora_B, scaling, *,
                tm=256, tn=256, tk=512):
    """x: (..., in_features). Returns (..., out_features)."""
    orig_shape = x.shape
    K = orig_shape[-1]          # in_features
    N = weight.shape[0]         # out_features
    r = lora_A.shape[0]
    x2d = x.reshape(-1, K)
    M = x2d.shape[0]
    dt = x.dtype

    # Clamp tile sizes for small problems (block dims must be multiples of
    # 8 / 128 or equal the (padded) full dim), then pad everything to tiles.
    tm = min(tm, _round_up(M, 8))
    tn = min(tn, _round_up(N, 128))
    tk = min(tk, _round_up(K, 128))
    Mp = _round_up(M, tm)
    Np = _round_up(N, tn)
    Kp = _round_up(K, tk)
    rp = _round_up(r, 128)      # lane-friendly LoRA rank padding

    x_p = jnp.zeros((Mp, Kp), dt).at[:M, :K].set(x2d)
    # Pre-transpose so the kernel never materializes a transpose in VMEM.
    w_t = jnp.zeros((Kp, Np), weight.dtype).at[:K, :N].set(weight.T)
    # Pre-fold `scaling` into lora_A (scales an (r, K) matrix once).
    a_scaled = lora_A * jnp.asarray(scaling, lora_A.dtype)
    a_t = jnp.zeros((Kp, rp), lora_A.dtype).at[:K, :r].set(a_scaled.T)
    b_t = jnp.zeros((rp, Np), lora_B.dtype).at[:r, :N].set(lora_B.T)
    if bias is None:
        bias_p = jnp.zeros((1, Np), dt)
    else:
        bias_p = jnp.zeros((1, Np), bias.dtype).at[0, :N].set(bias)

    grid = (Mp // tm, Np // tn, Kp // tk)

    out_p = pl.pallas_call(
        _lora_linear_kernel,
        out_shape=jax.ShapeDtypeStruct((Mp, Np), dt),
        grid_spec=pltpu.PrefetchScalarGridSpec(
            num_scalar_prefetch=0,
            grid=grid,
            in_specs=[
                pl.BlockSpec((tm, tk), lambda i, j, k: (i, k)),   # x tile
                pl.BlockSpec((tk, tn), lambda i, j, k: (k, j)),   # W^T tile
                pl.BlockSpec((tk, rp), lambda i, j, k: (k, 0)),   # A^T*scaling
                pl.BlockSpec((rp, tn), lambda i, j, k: (0, j)),   # B^T tile
                pl.BlockSpec((1, tn), lambda i, j, k: (0, j)),    # bias tile
            ],
            out_specs=pl.BlockSpec((tm, tn), lambda i, j, k: (i, j)),
            scratch_shapes=[
                pltpu.VMEM((tm, tn), jnp.float32),   # base accumulator
                pltpu.VMEM((tm, rp), jnp.float32),   # x @ A^T accumulator
            ]),
        compiler_params=pltpu.CompilerParams(
            dimension_semantics=("parallel", "parallel", "arbitrary")),
    )(x_p, w_t, a_t, b_t, bias_p)

    return out_p[:M, :N].reshape(*orig_shape[:-1], N)


if __name__ == "__main__":
    # Small shapes consistent with the module: batch=2, seq=8, hidden=32.
    batch, seq = 2, 8
    in_features, out_features = 32, 64
    r, lora_alpha = 32, 32
    scaling = lora_alpha / r

    key = jax.random.PRNGKey(0)
    kx, kw, kb, ka, kB = jax.random.split(key, 5)

    x = jax.random.normal(kx, (batch, seq, in_features), dtype=jnp.float32)
    weight = jax.random.normal(kw, (out_features, in_features),
                               dtype=jnp.float32) * 0.05
    bias = jax.random.normal(kb, (out_features,), dtype=jnp.float32) * 0.01

    # reset_parameters(): lora_A ~ kaiming_uniform(a=sqrt(5)) -> U(-1/sqrt(fan_in), 1/sqrt(fan_in))
    bound_a = 1.0 / (in_features ** 0.5)
    lora_A = jax.random.uniform(ka, (r, in_features), dtype=jnp.float32,
                                minval=-bound_a, maxval=bound_a)
    # reset_parameters() zeroes lora_B; use a deterministic non-zero init here
    # so the LoRA branch of the kernel is actually exercised.
    lora_B = jax.random.normal(kB, (out_features, r), dtype=jnp.float32) * 0.02

    out = lora_linear(x, weight, bias, lora_A, lora_B, scaling)
    out = jax.block_until_ready(out)

    # Pure-JAX reference for correctness.
    ref = (x @ weight.T + bias
           + (x @ lora_A.T) @ lora_B.T * scaling)

    assert out.shape == (batch, seq, out_features)
    assert jnp.allclose(out, ref, atol=1e-4, rtol=1e-4), "mismatch vs reference"
    print("KERNEL_OK")
</pallas_src>

<mosaic_0001>
module attributes {stable_mosaic.version = 11 : i64} {
  func.func @_lora_linear_kernel(%arg0: i32, %arg1: i32, %arg2: i32, %arg3: memref<16x128xf32, #tpu.memory_space<vmem>>, %arg4: memref<128x128xf32, #tpu.memory_space<vmem>>, %arg5: memref<128x128xf32, #tpu.memory_space<vmem>>, %arg6: memref<128x128xf32, #tpu.memory_space<vmem>>, %arg7: memref<1x128xf32, #tpu.memory_space<vmem>>, %arg8: memref<16x128xf32, #tpu.memory_space<vmem>>, %arg9: memref<16x128xf32, #tpu.memory_space<vmem>>, %arg10: memref<16x128xf32, #tpu.memory_space<vmem>>) attributes {dimension_semantics = [#tpu.dimension_semantics<parallel>, #tpu.dimension_semantics<parallel>, #tpu.dimension_semantics<arbitrary>], iteration_bounds = array<i64: 1, 1, 1>, scalar_prefetch = 0 : i64, scratch_operands = 2 : i64, tpu.core_type = #tpu.core_type<tc>, window_params = [{transform_indices = @transform_0, window_bounds = array<i64: 16, 128>}, {transform_indices = @transform_1, window_bounds = array<i64: 128, 128>}, {transform_indices = @transform_2, window_bounds = array<i64: 128, 128>}, {transform_indices = @transform_3, window_bounds = array<i64: 128, 128>}, {transform_indices = @transform_4, window_bounds = array<i64: 1, 128>}, {transform_indices = @transform_5, window_bounds = array<i64: 16, 128>}]} {
    %c0_i32 = arith.constant 0 : i32
    %0 = arith.cmpi eq, %arg2, %c0_i32 : i32
    %1 = arith.extui %0 : i1 to i32
    %c0_i32_0 = arith.constant 0 : i32
    %2 = arith.cmpi ne, %1, %c0_i32_0 : i32
    scf.if %2 {
      %cst_17 = arith.constant 0.000000e+00 : f32
      %17 = vector.broadcast %cst_17 : f32 to vector<16x128xf32>
      %c0_18 = arith.constant 0 : index
      %c0_19 = arith.constant 0 : index
      %18 = vector.load %arg9[%c0_18, %c0_19] : memref<16x128xf32, #tpu.memory_space<vmem>>, vector<16x128xf32>
      tpu.vector_store %arg9[%c0_18, %c0_19], %17 {strides = array<i32>} : memref<16x128xf32, #tpu.memory_space<vmem>>, vector<16x128xf32>,
      %cst_20 = arith.constant 0.000000e+00 : f32
      %19 = vector.broadcast %cst_20 : f32 to vector<16x128xf32>
      %c0_21 = arith.constant 0 : index
      %c0_22 = arith.constant 0 : index
      %20 = vector.load %arg10[%c0_21, %c0_22] : memref<16x128xf32, #tpu.memory_space<vmem>>, vector<16x128xf32>
      tpu.vector_store %arg10[%c0_21, %c0_22], %19 {strides = array<i32>} : memref<16x128xf32, #tpu.memory_space<vmem>>, vector<16x128xf32>,
    } else {
    }
    %c0 = arith.constant 0 : index
    %c0_1 = arith.constant 0 : index
    %3 = vector.load %arg3[%c0, %c0_1] : memref<16x128xf32, #tpu.memory_space<vmem>>, vector<16x128xf32>
    %c0_2 = arith.constant 0 : index
    %c0_3 = arith.constant 0 : index
    %4 = vector.load %arg9[%c0_2, %c0_3] : memref<16x128xf32, #tpu.memory_space<vmem>>, vector<16x128xf32>
    %c0_4 = arith.constant 0 : index
    %c0_5 = arith.constant 0 : index
    %5 = vector.load %arg4[%c0_4, %c0_5] : memref<128x128xf32, #tpu.memory_space<vmem>>, vector<128x128xf32>
    %cst = arith.constant dense<0.000000e+00> : vector<16x128xf32>
    %6 = tpu.matmul %3, %5, %cst {dimension_numbers = #tpu.dot_dimension_numbers<[1], [0], [0], [1], [0, 0, 1, 1], [], []>} : vector<16x128xf32>, vector<128x128xf32>, vector<16x128xf32> -> vector<16x128xf32>
    %7 = arith.addf %4, %6 : vector<16x128xf32>
    %c0_6 = arith.constant 0 : index
    %c0_7 = arith.constant 0 : index
    %8 = vector.load %arg9[%c0_6, %c0_7] : memref<16x128xf32, #tpu.memory_space<vmem>>, vector<16x128xf32>
    tpu.vector_store %arg9[%c0_6, %c0_7], %7 {strides = array<i32>} : memref<16x128xf32, #tpu.memory_space<vmem>>, vector<16x128xf32>,
    %c0_8 = arith.constant 0 : index
    %c0_9 = arith.constant 0 : index
    %9 = vector.load %arg10[%c0_8, %c0_9] : memref<16x128xf32, #tpu.memory_space<vmem>>, vector<16x128xf32>
    %c0_10 = arith.constant 0 : index
    %c0_11 = arith.constant 0 : index
    %10 = vector.load %arg5[%c0_10, %c0_11] : memref<128x128xf32, #tpu.memory_space<vmem>>, vector<128x128xf32>
    %cst_12 = arith.constant dense<0.000000e+00> : vector<16x128xf32>
    %11 = tpu.matmul %3, %10, %cst_12 {dimension_numbers = #tpu.dot_dimension_numbers<[1], [0], [0], [1], [0, 0, 1, 1], [], []>} : vector<16x128xf32>, vector<128x128xf32>, vector<16x128xf32> -> vector<16x128xf32>
    %12 = arith.addf %9, %11 : vector<16x128xf32>
    %c0_13 = arith.constant 0 : index
    %c0_14 = arith.constant 0 : index
    %13 = vector.load %arg10[%c0_13, %c0_14] : memref<16x128xf32, #tpu.memory_space<vmem>>, vector<16x128xf32>
    tpu.vector_store %arg10[%c0_13, %c0_14], %12 {strides = array<i32>} : memref<16x128xf32, #tpu.memory_space<vmem>>, vector<16x128xf32>,
    %c0_i32_15 = arith.constant 0 : i32
    %14 = arith.cmpi eq, %arg2, %c0_i32_15 : i32
    %15 = arith.extui %14 : i1 to i32
    %c0_i32_16 = arith.constant 0 : i32
    %16 = arith.cmpi ne, %15, %c0_i32_16 : i32
    scf.if %16 {
      %c0_17 = arith.constant 0 : index
      %c0_18 = arith.constant 0 : index
      %17 = vector.load %arg10[%c0_17, %c0_18] : memref<16x128xf32, #tpu.memory_space<vmem>>, vector<16x128xf32>
      %c0_19 = arith.constant 0 : index
      %c0_20 = arith.constant 0 : index
      %18 = vector.load %arg6[%c0_19, %c0_20] : memref<128x128xf32, #tpu.memory_space<vmem>>, vector<128x128xf32>
      %cst_21 = arith.constant dense<0.000000e+00> : vector<16x128xf32>
      %19 = tpu.matmul %17, %18, %cst_21 {dimension_numbers = #tpu.dot_dimension_numbers<[1], [0], [0], [1], [0, 0, 1, 1], [], []>} : vector<16x128xf32>, vector<128x128xf32>, vector<16x128xf32> -> vector<16x128xf32>
      %c0_22 = arith.constant 0 : index
      %c0_23 = arith.constant 0 : index
      %20 = vector.load %arg9[%c0_22, %c0_23] : memref<16x128xf32, #tpu.memory_space<vmem>>, vector<16x128xf32>
      %c0_24 = arith.constant 0 : index
      %c0_25 = arith.constant 0 : index
      %21 = vector.load %arg7[%c0_24, %c0_25] : memref<1x128xf32, #tpu.memory_space<vmem>>, vector<1x128xf32>
      %22 = vector.broadcast %21 : vector<1x128xf32> to vector<16x128xf32>
      %23 = arith.addf %20, %22 : vector<16x128xf32>
      %24 = arith.addf %23, %19 : vector<16x128xf32>
      %c0_26 = arith.constant 0 : index
      %c0_27 = arith.constant 0 : index
      %25 = vector.load %arg8[%c0_26, %c0_27] : memref<16x128xf32, #tpu.memory_space<vmem>>, vector<16x128xf32>
      tpu.vector_store %arg8[%c0_26, %c0_27], %24 {strides = array<i32>} : memref<16x128xf32, #tpu.memory_space<vmem>>, vector<16x128xf32>,
    } else {
    }
    return
  }
  func.func @transform_0(%arg0: i32, %arg1: i32, %arg2: i32) -> (i32, i32) {
    %c0_i32 = arith.constant 0 : i32
    return %arg0, %arg2 : i32, i32
  }
  func.func @transform_1(%arg0: i32, %arg1: i32, %arg2: i32) -> (i32, i32) {
    %c0_i32 = arith.constant 0 : i32
    return %arg2, %arg1 : i32, i32
  }
  func.func @transform_2(%arg0: i32, %arg1: i32, %arg2: i32) -> (i32, i32) {
    %c0_i32 = arith.constant 0 : i32
    %c0_i32_0 = arith.constant 0 : i32
    return %arg2, %c0_i32 : i32, i32
  }
  func.func @transform_3(%arg0: i32, %arg1: i32, %arg2: i32) -> (i32, i32) {
    %c0_i32 = arith.constant 0 : i32
    %c0_i32_0 = arith.constant 0 : i32
    return %c0_i32, %arg1 : i32, i32
  }
  func.func @transform_4(%arg0: i32, %arg1: i32, %arg2: i32) -> (i32, i32) {
    %c0_i32 = arith.constant 0 : i32
    %c0_i32_0 = arith.constant 0 : i32
    return %c0_i32, %arg1 : i32, i32
  }
  func.func @transform_5(%arg0: i32, %arg1: i32, %arg2: i32) -> (i32, i32) {
    %c0_i32 = arith.constant 0 : i32
    return %arg0, %arg1 : i32, i32
  }
}

</mosaic_0001>

<llo_original>
// kernel: tpu_custom_call.1
$region0: #{tpu_custom_call.1}
  #allocation0 [shape = 'u32[]', space=smem, size = 0x4, offset = 0x4, fixed_abs, tag = 'smem constant byte address 0x4 - core index']
  #allocation1 [shape = 'u32[144,128]{1,0:T(1,128)}', space=vmem, size = 0x12000, scoped, tag = 'internal scratch']
  #allocation2 [shape = 'f32[16,128]{1,0:T(8,128)}', space=vmem, size = 0x2000, scoped, tag = 'scratch operand']
  #allocation3 [shape = 'f32[16,128]{1,0:T(8,128)}', space=vmem, size = 0x2000, scoped, tag = 'scratch operand']
  %s0 = inlined_call_operand.hbm [shape: f32[16,128], index: 0, kind: input, shape index: {}]
  %s1 = inlined_call_operand.hbm [shape: f32[128,128], index: 1, kind: input, shape index: {}]
  %s2 = inlined_call_operand.hbm [shape: f32[128,128], index: 2, kind: input, shape index: {}]
  %s3 = inlined_call_operand.hbm [shape: f32[128,128], index: 3, kind: input, shape index: {}]
  %s4 = inlined_call_operand.vmem [shape: f32[1,128], index: 4, kind: input, shape index: {}]
  %s5 = inlined_call_operand.hbm [shape: f32[16,128], index: 5, kind: output, shape index: {}]
  %s6 = sld [smem:[#allocation0]]
  $region54: #{tpu_custom_call.1} parent=0
    _
  %s8 = ssub.s32 1, %s6
  %s9 = scalar_select 0, %s8, %s6
  $region1: #{tpu_custom_call.1} parent=0
    #allocation4 [shape = 'u8[8192]{0}', space=vmem, size = 0x2000, scoped, tag = 'input window, operand 0, single buffered']
    #allocation5 [shape = 's32[1]{0}', space=sflag, size = 0x4, scoped, tag = 'scoped memory for tpu_custom_call.1']
    #allocation6 [shape = 's32[1]{0}', space=sflag, size = 0x4, scoped, tag = 'scoped memory for tpu_custom_call.1']
    #allocation7 [shape = 'u8[65536]{0}', space=vmem, size = 0x10000, scoped, tag = 'input window, operand 1, single buffered']
    #allocation8 [shape = 's32[1]{0}', space=sflag, size = 0x4, scoped, tag = 'scoped memory for tpu_custom_call.1']
    #allocation9 [shape = 'u8[65536]{0}', space=vmem, size = 0x10000, scoped, tag = 'input window, operand 2, single buffered']
    #allocation10 [shape = 'u8[65536]{0}', space=vmem, size = 0x10000, scoped, tag = 'input window, operand 3, single buffered']
    #allocation11 [shape = 's32[1]{0}', space=sflag, size = 0x4, scoped, tag = 'scoped memory for tpu_custom_call.1']
    #allocation12 [shape = 'u8[8192]{0}', space=vmem, size = 0x2000, scoped, tag = 'output window, operand 0, single buffered']
    %10 = vsyncpa [#allocation5], 0
    %11 = vsyncpa [#allocation8], 0
    %12 = vsyncpa [#allocation11], 0
    %13 = vsyncpa [#allocation6], 0
    // Predicated region
    $region2: #{tpu_custom_call.1} parent=1 // pred_check
      _
    $region3: #{tpu_custom_call.1} parent=1 // pred_check_branch
      %15 = sbr.rel (0) target = $region5
    $region4: #{tpu_custom_call.1} parent=1 // pred_region
      %s17 = ssub.s32 256, 256
      %18 = vsyncadd [#allocation5], %s17
      %s19 = sshll.u32 [#allocation4], 4
      %s20 = int_to_ptr.vmem [resolvable:$true] %s19
      %25 = dma.hbm_to_vmem [thread:$0]  %s0, 256, %s20, [#allocation5], 128, 128, 8
    $region5: #{tpu_custom_call.1} parent=1 // pred_fallthru
      _
    // Predicated region
    $region6: #{tpu_custom_call.1} parent=1 // pred_check
      _
    $region7: #{tpu_custom_call.1} parent=1 // pred_check_branch
      %27 = sbr.rel (0) target = $region9
    $region8: #{tpu_custom_call.1} parent=1 // pred_region
      %s29 = ssub.s32 2048, 2048
      %30 = vsyncadd [#allocation8], %s29
      %s31 = sshll.u32 [#allocation7], 4
      %s32 = int_to_ptr.vmem [resolvable:$true] %s31
      %37 = dma.hbm_to_vmem [thread:$0]  %s1, 2048, %s32, [#allocation8], 128, 128, 8
    $region9: #{tpu_custom_call.1} parent=1 // pred_fallthru
      _
    // Predicated region
    $region10: #{tpu_custom_call.1} parent=1 // pred_check
      _
    $region11: #{tpu_custom_call.1} parent=1 // pred_check_branch
      %39 = sbr.rel (0) target = $region13
    $region12: #{tpu_custom_call.1} parent=1 // pred_region
      %s41 = ssub.s32 2048, 2048
      %42 = vsyncadd [#allocation8], %s41
      %s43 = sshll.u32 [#allocation9], 4
      %s44 = int_to_ptr.vmem [resolvable:$true] %s43
      %49 = dma.hbm_to_vmem [thread:$0]  %s2, 2048, %s44, [#allocation8], 128, 128, 8
    $region13: #{tpu_custom_call.1} parent=1 // pred_fallthru
      _
    // Predicated region
    $region14: #{tpu_custom_call.1} parent=1 // pred_check
      _
    $region15: #{tpu_custom_call.1} parent=1 // pred_check_branch
      %51 = sbr.rel (0) target = $region17
    $region16: #{tpu_custom_call.1} parent=1 // pred_region
      %s53 = ssub.s32 2048, 2048
      %54 = vsyncadd [#allocation11], %s53
      %s55 = sshll.u32 [#allocation10], 4
      %s56 = int_to_ptr.vmem [resolvable:$true] %s55
      %61 = dma.hbm_to_vmem [thread:$0]  %s3, 2048, %s56, [#allocation11], 128, 128, 8
    $region17: #{tpu_custom_call.1} parent=1 // pred_fallthru
      _
    // Predicated region
    $region18: #{tpu_custom_call.1} parent=1 // pred_check
      _
    $region19: #{tpu_custom_call.1} parent=1 // pred_check_branch
      %63 = sbr.rel (0) target = $region21
    $region20: #{tpu_custom_call.1} parent=1 // pred_region
      _
    $region21: #{tpu_custom_call.1} parent=1 // pred_fallthru
      _
    // Predicated region
    $region22: #{tpu_custom_call.1} parent=1 // pred_check
      _
    $region23: #{tpu_custom_call.1} parent=1 // pred_check_branch
      %65 = sbr.rel (0) target = $region25
    $region24: #{tpu_custom_call.1} parent=1 // pred_region
      %66 = dma.done [#allocation5], 256
    $region25: #{tpu_custom_call.1} parent=1 // pred_fallthru
      _
    // Predicated region
    $region26: #{tpu_custom_call.1} parent=1 // pred_check
      _
    $region27: #{tpu_custom_call.1} parent=1 // pred_check_branch
      %68 = sbr.rel (0) target = $region29
    $region28: #{tpu_custom_call.1} parent=1 // pred_region
      %69 = dma.done [#allocation8], 2048
    $region29: #{tpu_custom_call.1} parent=1 // pred_fallthru
      _
    // Predicated region
    $region30: #{tpu_custom_call.1} parent=1 // pred_check
      _
    $region31: #{tpu_custom_call.1} parent=1 // pred_check_branch
      %71 = sbr.rel (0) target = $region33
    $region32: #{tpu_custom_call.1} parent=1 // pred_region
      %72 = dma.done [#allocation8], 2048
    $region33: #{tpu_custom_call.1} parent=1 // pred_fallthru
      _
    // Predicated region
    $region34: #{tpu_custom_call.1} parent=1 // pred_check
      _
    $region35: #{tpu_custom_call.1} parent=1 // pred_check_branch
      %74 = sbr.rel (0) target = $region37
    $region36: #{tpu_custom_call.1} parent=1 // pred_region
      %75 = dma.done [#allocation11], 2048
    $region37: #{tpu_custom_call.1} parent=1 // pred_fallthru
      _
    %p76 = scmp.eq.s32.totalorder 0, 0
    // Predicated region
    $region38: #{tpu_custom_call.1} parent=1 // pred_check
      %p77 = pneg %p76
    $region39: #{tpu_custom_call.1} parent=1 // pred_check_branch
      %79 = sbr.rel (%p77) target = $region41
    $region40: #{tpu_custom_call.1} parent=1 // pred_region
      %80 = vst [vmem:[#allocation2] sm:$0xff] 0.0
      %81 = vst [vmem:[#allocation2 + $0x8] sm:$0xff] 0.0
      %82 = vst [vmem:[#allocation3] sm:$0xff] 0.0
      %83 = vst [vmem:[#allocation3 + $0x8] sm:$0xff] 0.0
    $region41: #{tpu_custom_call.1} parent=1 // pred_fallthru
      _
    %v84 = vld [vmem:[#allocation4] sm:$0xff]
    %v85 = vld [vmem:[#allocation4 + $0x8] sm:$0xff]
    %v86 = vld [vmem:[#allocation2] sm:$0xff]
    %v87 = vld [vmem:[#allocation2 + $0x8] sm:$0xff]
    %v88 = vld [vmem:[#allocation7] sm:$0xff]
    %v89 = vld [vmem:[#allocation7 + $0x8] sm:$0xff]
    %v90 = vld [vmem:[#allocation7 + $0x10] sm:$0xff]
    %v91 = vld [vmem:[#allocation7 + $0x18] sm:$0xff]
    %v92 = vld [vmem:[#allocation7 + $0x20] sm:$0xff]
    %v93 = vld [vmem:[#allocation7 + $0x28] sm:$0xff]
    %v94 = vld [vmem:[#allocation7 + $0x30] sm:$0xff]
    %v95 = vld [vmem:[#allocation7 + $0x38] sm:$0xff]
    %v96 = vld [vmem:[#allocation7 + $0x40] sm:$0xff]
    %v97 = vld [vmem:[#allocation7 + $0x48] sm:$0xff]
    %v98 = vld [vmem:[#allocation7 + $0x50] sm:$0xff]
    %v99 = vld [vmem:[#allocation7 + $0x58] sm:$0xff]
    %v100 = vld [vmem:[#allocation7 + $0x60] sm:$0xff]
    %v101 = vld [vmem:[#allocation7 + $0x68] sm:$0xff]
    %v102 = vld [vmem:[#allocation7 + $0x70] sm:$0xff]
    %v103 = vld [vmem:[#allocation7 + $0x78] sm:$0xff]
    %104 = vmatprep.subr.mxu0 0.0
    %105 = vmatpush1.msra.mxu0 %v103
    %106 = vmatprep.subr.mxu0 0.0
    %107 = vmatpush1.msra.mxu0 %v102
    %108 = vmatprep.subr.mxu0 0.0
    %109 = vmatpush1.msra.mxu0 %v101
    %110 = vmatprep.subr.mxu0 0.0
    %111 = vmatpush1.msra.mxu0 %v100
    %112 = vmatprep.subr.mxu0 0.0
    %113 = vmatpush1.msra.mxu0 %v99
    %114 = vmatprep.subr.mxu0 0.0
    %115 = vmatpush1.msra.mxu0 %v98
    %116 = vmatprep.subr.mxu0 0.0
    %117 = vmatpush1.msra.mxu0 %v97
    %118 = vmatprep.subr.mxu0 0.0
    %119 = vmatpush1.msra.mxu0 %v96
    %120 = vmatprep.subr.mxu0 0.0
    %121 = vmatpush1.msra.mxu0 %v95
    %122 = vmatprep.subr.mxu0 0.0
    %123 = vmatpush1.msra.mxu0 %v94
    %124 = vmatprep.subr.mxu0 0.0
    %125 = vmatpush1.msra.mxu0 %v93
    %126 = vmatprep.subr.mxu0 0.0
    %127 = vmatpush1.msra.mxu0 %v92
    %128 = vmatprep.subr.mxu0 0.0
    %129 = vmatpush1.msra.mxu0 %v91
    %130 = vmatprep.subr.mxu0 0.0
    %131 = vmatpush1.msra.mxu0 %v90
    %132 = vmatprep.subr.mxu0 0.0
    %133 = vmatpush1.msra.mxu0 %v89
    %134 = vmatprep.subr.mxu0 0.0
    %135 = vmatpush1.msra.mxu0 %v88
    %136 = vmatprep.subr.mxu0 0.0
    %137 = vmatpush2.msra.mxu0 0.0
    %138 = vmatprep.subr.mxu0 0.0
    %139 = vmatpush2.msra.mxu0 0.0
    %140 = vmatprep.subr.mxu0 0.0
    %141 = vmatpush2.msra.mxu0 0.0
    %142 = vmatprep.subr.mxu0 0.0
    %143 = vmatpush2.msra.mxu0 0.0
    %144 = vmatprep.subr.mxu0 0.0
    %145 = vmatpush2.msra.mxu0 0.0
    %146 = vmatprep.subr.mxu0 0.0
    %147 = vmatpush2.msra.mxu0 0.0
    %148 = vmatprep.subr.mxu0 0.0
    %149 = vmatpush2.msra.mxu0 0.0
    %150 = vmatprep.subr.mxu0 0.0
    %151 = vmatpush2.msra.mxu0 0.0
    %152 = vmatprep.subr.mxu0 0.0
    %153 = vmatpush2.msra.mxu0 0.0
    %154 = vmatprep.subr.mxu0 0.0
    %155 = vmatpush2.msra.mxu0 0.0
    %156 = vmatprep.subr.mxu0 0.0
    %157 = vmatpush2.msra.mxu0 0.0
    %158 = vmatprep.subr.mxu0 0.0
    %159 = vmatpush2.msra.mxu0 0.0
    %160 = vmatprep.subr.mxu0 0.0
    %161 = vmatpush2.msra.mxu0 0.0
    %162 = vmatprep.subr.mxu0 0.0
    %163 = vmatpush2.msra.mxu0 0.0
    %164 = vmatprep.subr.mxu0 0.0
    %165 = vmatpush2.msra.mxu0 0.0
    %166 = vmatprep.subr.mxu0 0.0
    %167 = vmatpush2.msra.mxu0 0.0
    %168 = vmatprep.mubr.f32.mxu0 0.0
    %169 = vmatmul.mubr.f32.gmra.mxu0 %v84
    %v170 = vpop.f32.mrf.mxu0
    %v171 = vadd.f32 0.0, %v170
    %v172 = vpop.f32.mrf.mxu0
    %173 = vmatprep.mubr.f32.mxu0 0.0
    %174 = vmatmul.mubr.f32.gmra.mxu0 %v85
    %v175 = vpop.f32.mrf.mxu0
    %v176 = vadd.f32 0.0, %v175
    %v177 = vpop.f32.mrf.mxu0
    %178 = vdwg.mxu0
    %v179 = vadd.f32 %v86, %v171
    %v180 = vadd.f32 %v87, %v176
    %181 = vst [vmem:[#allocation2] sm:$0xff] %v179
    %182 = vst [vmem:[#allocation2 + $0x8] sm:$0xff] %v180
    %v183 = vld [vmem:[#allocation3] sm:$0xff]
    %v184 = vld [vmem:[#allocation3 + $0x8] sm:$0xff]
    %v185 = vld [vmem:[#allocation9] sm:$0xff]
    %v186 = vld [vmem:[#allocation9 + $0x8] sm:$0xff]
    %v187 = vld [vmem:[#allocation9 + $0x10] sm:$0xff]
    %v188 = vld [vmem:[#allocation9 + $0x18] sm:$0xff]
    %v189 = vld [vmem:[#allocation9 + $0x20] sm:$0xff]
    %v190 = vld [vmem:[#allocation9 + $0x28] sm:$0xff]
    %v191 = vld [vmem:[#allocation9 + $0x30] sm:$0xff]
    %v192 = vld [vmem:[#allocation9 + $0x38] sm:$0xff]
    %v193 = vld [vmem:[#allocation9 + $0x40] sm:$0xff]
    %v194 = vld [vmem:[#allocation9 + $0x48] sm:$0xff]
    %v195 = vld [vmem:[#allocation9 + $0x50] sm:$0xff]
    %v196 = vld [vmem:[#allocation9 + $0x58] sm:$0xff]
    %v197 = vld [vmem:[#allocation9 + $0x60] sm:$0xff]
    %v198 = vld [vmem:[#allocation9 + $0x68] sm:$0xff]
    %v199 = vld [vmem:[#allocation9 + $0x70] sm:$0xff]
    %v200 = vld [vmem:[#allocation9 + $0x78] sm:$0xff]
    %201 = vmatprep.subr.mxu0 0.0
    %202 = vmatpush1.msra.mxu0 %v200
    %203 = vmatprep.subr.mxu0 0.0
    %204 = vmatpush1.msra.mxu0 %v199
    %205 = vmatprep.subr.mxu0 0.0
    %206 = vmatpush1.msra.mxu0 %v198
    %207 = vmatprep.subr.mxu0 0.0
    %208 = vmatpush1.msra.mxu0 %v197
    %209 = vmatprep.subr.mxu0 0.0
    %210 = vmatpush1.msra.mxu0 %v196
    %211 = vmatprep.subr.mxu0 0.0
    %212 = vmatpush1.msra.mxu0 %v195
    %213 = vmatprep.subr.mxu0 0.0
    %214 = vmatpush1.msra.mxu0 %v194
    %215 = vmatprep.subr.mxu0 0.0
    %216 = vmatpush1.msra.mxu0 %v193
    %217 = vmatprep.subr.mxu0 0.0
    %218 = vmatpush1.msra.mxu0 %v192
    %219 = vmatprep.subr.mxu0 0.0
    %220 = vmatpush1.msra.mxu0 %v191
    %221 = vmatprep.subr.mxu0 0.0
    %222 = vmatpush1.msra.mxu0 %v190
    %223 = vmatprep.subr.mxu0 0.0
    %224 = vmatpush1.msra.mxu0 %v189
    %225 = vmatprep.subr.mxu0 0.0
    %226 = vmatpush1.msra.mxu0 %v188
    %227 = vmatprep.subr.mxu0 0.0
    %228 = vmatpush1.msra.mxu0 %v187
    %229 = vmatprep.subr.mxu0 0.0
    %230 = vmatpush1.msra.mxu0 %v186
    %231 = vmatprep.subr.mxu0 0.0
    %232 = vmatpush1.msra.mxu0 %v185
    %233 = vmatprep.subr.mxu0 0.0
    %234 = vmatpush2.msra.mxu0 0.0
    %235 = vmatprep.subr.mxu0 0.0
    %236 = vmatpush2.msra.mxu0 0.0
    %237 = vmatprep.subr.mxu0 0.0
    %238 = vmatpush2.msra.mxu0 0.0
    %239 = vmatprep.subr.mxu0 0.0
    %240 = vmatpush2.msra.mxu0 0.0
    %241 = vmatprep.subr.mxu0 0.0
    %242 = vmatpush2.msra.mxu0 0.0
    %243 = vmatprep.subr.mxu0 0.0
    %244 = vmatpush2.msra.mxu0 0.0
    %245 = vmatprep.subr.mxu0 0.0
    %246 = vmatpush2.msra.mxu0 0.0
    %247 = vmatprep.subr.mxu0 0.0
    %248 = vmatpush2.msra.mxu0 0.0
    %249 = vmatprep.subr.mxu0 0.0
    %250 = vmatpush2.msra.mxu0 0.0
    %251 = vmatprep.subr.mxu0 0.0
    %252 = vmatpush2.msra.mxu0 0.0
    %253 = vmatprep.subr.mxu0 0.0
    %254 = vmatpush2.msra.mxu0 0.0
    %255 = vmatprep.subr.mxu0 0.0
    %256 = vmatpush2.msra.mxu0 0.0
    %257 = vmatprep.subr.mxu0 0.0
    %258 = vmatpush2.msra.mxu0 0.0
    %259 = vmatprep.subr.mxu0 0.0
    %260 = vmatpush2.msra.mxu0 0.0
    %261 = vmatprep.subr.mxu0 0.0
    %262 = vmatpush2.msra.mxu0 0.0
    %263 = vmatprep.subr.mxu0 0.0
    %264 = vmatpush2.msra.mxu0 0.0
    %265 = vmatprep.mubr.f32.mxu0 0.0
    %266 = vmatmul.mubr.f32.gmra.mxu0 %v84
    %v267 = vpop.f32.mrf.mxu0
    %v268 = vadd.f32 0.0, %v267
    %v269 = vpop.f32.mrf.mxu0
    %270 = vmatprep.mubr.f32.mxu0 0.0
    %271 = vmatmul.mubr.f32.gmra.mxu0 %v85
    %v272 = vpop.f32.mrf.mxu0
    %v273 = vadd.f32 0.0, %v272
    %v274 = vpop.f32.mrf.mxu0
    %275 = vdwg.mxu0
    %v276 = vadd.f32 %v183, %v268
    %v277 = vadd.f32 %v184, %v273
    %278 = vst [vmem:[#allocation3] sm:$0xff] %v276
    %279 = vst [vmem:[#allocation3 + $0x8] sm:$0xff] %v277
    // Predicated region
    $region42: #{tpu_custom_call.1} parent=1 // pred_check
      %p280 = pneg %p76
    $region43: #{tpu_custom_call.1} parent=1 // pred_check_branch
      %282 = sbr.rel (%p280) target = $region45
    $region44: #{tpu_custom_call.1} parent=1 // pred_region
      %v283 = vld [vmem:[#allocation3] sm:$0xff]
      %v284 = vld [vmem:[#allocation3 + $0x8] sm:$0xff]
      %v285 = vld [vmem:[#allocation10] sm:$0xff]
      %v286 = vld [vmem:[#allocation10 + $0x8] sm:$0xff]
      %v287 = vld [vmem:[#allocation10 + $0x10] sm:$0xff]
      %v288 = vld [vmem:[#allocation10 + $0x18] sm:$0xff]
      %v289 = vld [vmem:[#allocation10 + $0x20] sm:$0xff]
      %v290 = vld [vmem:[#allocation10 + $0x28] sm:$0xff]
      %v291 = vld [vmem:[#allocation10 + $0x30] sm:$0xff]
      %v292 = vld [vmem:[#allocation10 + $0x38] sm:$0xff]
      %v293 = vld [vmem:[#allocation10 + $0x40] sm:$0xff]
      %v294 = vld [vmem:[#allocation10 + $0x48] sm:$0xff]
      %v295 = vld [vmem:[#allocation10 + $0x50] sm:$0xff]
      %v296 = vld [vmem:[#allocation10 + $0x58] sm:$0xff]
      %v297 = vld [vmem:[#allocation10 + $0x60] sm:$0xff]
      %v298 = vld [vmem:[#allocation10 + $0x68] sm:$0xff]
      %v299 = vld [vmem:[#allocation10 + $0x70] sm:$0xff]
      %v300 = vld [vmem:[#allocation10 + $0x78] sm:$0xff]
      %301 = vmatprep.subr.mxu0 0.0
      %302 = vmatpush1.msra.mxu0 %v300
      %303 = vmatprep.subr.mxu0 0.0
      %304 = vmatpush1.msra.mxu0 %v299
      %305 = vmatprep.subr.mxu0 0.0
      %306 = vmatpush1.msra.mxu0 %v298
      %307 = vmatprep.subr.mxu0 0.0
      %308 = vmatpush1.msra.mxu0 %v297
      %309 = vmatprep.subr.mxu0 0.0
      %310 = vmatpush1.msra.mxu0 %v296
      %311 = vmatprep.subr.mxu0 0.0
      %312 = vmatpush1.msra.mxu0 %v295
      %313 = vmatprep.subr.mxu0 0.0
      %314 = vmatpush1.msra.mxu0 %v294
      %315 = vmatprep.subr.mxu0 0.0
      %316 = vmatpush1.msra.mxu0 %v293
      %317 = vmatprep.subr.mxu0 0.0
      %318 = vmatpush1.msra.mxu0 %v292
      %319 = vmatprep.subr.mxu0 0.0
      %320 = vmatpush1.msra.mxu0 %v291
      %321 = vmatprep.subr.mxu0 0.0
      %322 = vmatpush1.msra.mxu0 %v290
      %323 = vmatprep.subr.mxu0 0.0
      %324 = vmatpush1.msra.mxu0 %v289
      %325 = vmatprep.subr.mxu0 0.0
      %326 = vmatpush1.msra.mxu0 %v288
      %327 = vmatprep.subr.mxu0 0.0
      %328 = vmatpush1.msra.mxu0 %v287
      %329 = vmatprep.subr.mxu0 0.0
      %330 = vmatpush1.msra.mxu0 %v286
      %331 = vmatprep.subr.mxu0 0.0
      %332 = vmatpush1.msra.mxu0 %v285
      %333 = vmatprep.subr.mxu0 0.0
      %334 = vmatpush2.msra.mxu0 0.0
      %335 = vmatprep.subr.mxu0 0.0
      %336 = vmatpush2.msra.mxu0 0.0
      %337 = vmatprep.subr.mxu0 0.0
      %338 = vmatpush2.msra.mxu0 0.0
      %339 = vmatprep.subr.mxu0 0.0
      %340 = vmatpush2.msra.mxu0 0.0
      %341 = vmatprep.subr.mxu0 0.0
      %342 = vmatpush2.msra.mxu0 0.0
      %343 = vmatprep.subr.mxu0 0.0
      %344 = vmatpush2.msra.mxu0 0.0
      %345 = vmatprep.subr.mxu0 0.0
      %346 = vmatpush2.msra.mxu0 0.0
      %347 = vmatprep.subr.mxu0 0.0
      %348 = vmatpush2.msra.mxu0 0.0
      %349 = vmatprep.subr.mxu0 0.0
      %350 = vmatpush2.msra.mxu0 0.0
      %351 = vmatprep.subr.mxu0 0.0
      %352 = vmatpush2.msra.mxu0 0.0
      %353 = vmatprep.subr.mxu0 0.0
      %354 = vmatpush2.msra.mxu0 0.0
      %355 = vmatprep.subr.mxu0 0.0
      %356 = vmatpush2.msra.mxu0 0.0
      %357 = vmatprep.subr.mxu0 0.0
      %358 = vmatpush2.msra.mxu0 0.0
      %359 = vmatprep.subr.mxu0 0.0
      %360 = vmatpush2.msra.mxu0 0.0
      %361 = vmatprep.subr.mxu0 0.0
      %362 = vmatpush2.msra.mxu0 0.0
      %363 = vmatprep.subr.mxu0 0.0
      %364 = vmatpush2.msra.mxu0 0.0
      %365 = vmatprep.mubr.f32.mxu0 0.0
      %366 = vmatmul.mubr.f32.gmra.mxu0 %v283
      %v367 = vpop.f32.mrf.mxu0
      %v368 = vadd.f32 0.0, %v367
      %v369 = vpop.f32.mrf.mxu0
      %370 = vmatprep.mubr.f32.mxu0 0.0
      %371 = vmatmul.mubr.f32.gmra.mxu0 %v284
      %v372 = vpop.f32.mrf.mxu0
      %v373 = vadd.f32 0.0, %v372
      %v374 = vpop.f32.mrf.mxu0
      %375 = vdwg.mxu0
      %v376 = vld [vmem:[#allocation2] sm:$0xff]
      %v377 = vld [vmem:[#allocation2 + $0x8] sm:$0xff]
      %v378 = vld [vmem:[%s4] sm:$0x1]
      %v380 = vlaneseq
      %v381 = vshrl.u32 %v380, 7
      %v382 = vsub.s32 0, %v381
      %v383 = vrot.slane %v378, %v382
      %v385 = vadd.f32 %v376, %v383
      %v386 = vadd.f32 %v377, %v383
      %v387 = vadd.f32 %v385, %v368
      %v388 = vadd.f32 %v386, %v373
      %389 = vst [vmem:[#allocation12] sm:$0xff] %v387
      %390 = vst [vmem:[#allocation12 + $0x8] sm:$0xff] %v388
    $region45: #{tpu_custom_call.1} parent=1 // pred_fallthru
      _
    // Predicated region
    $region46: #{tpu_custom_call.1} parent=1 // pred_check
      _
    $region47: #{tpu_custom_call.1} parent=1 // pred_check_branch
      %392 = sbr.rel (0) target = $region49
    $region48: #{tpu_custom_call.1} parent=1 // pred_region
      %s394 = ssub.s32 256, 256
      %395 = vsyncadd [#allocation6], %s394
      %s396 = sshll.u32 [#allocation12], 4
      %s397 = int_to_ptr.vmem [resolvable:$true] %s396
      %402 = dma.vmem_to_hbm [thread:$0]  %s397, 256, %s5, [#allocation6], 128, 128, 8
    $region49: #{tpu_custom_call.1} parent=1 // pred_fallthru
      _
    // Predicated region
    $region50: #{tpu_custom_call.1} parent=1 // pred_check
      _
    $region51: #{tpu_custom_call.1} parent=1 // pred_check_branch
      %404 = sbr.rel (0) target = $region53
    $region52: #{tpu_custom_call.1} parent=1 // pred_region
      %405 = dma.done [#allocation6], 256
    $region53: #{tpu_custom_call.1} parent=1 // pred_fallthru
      _
    %406 = vsyncpa [#allocation5], 1
    %407 = vsyncpa [#allocation8], 1
    %408 = vsyncpa [#allocation11], 1
    %409 = vsyncpa [#allocation6], 1

</llo_original>
